<compile_context>
chip_gen: v6e
topology: v6e:2x2x1
jax: 0.10.0
libtpu: 0.0.40
codegen_flags: <defaults>
</compile_context>

<pallas_src>
import functools

import jax
import jax.numpy as jnp
from jax.experimental import pallas as pl
from jax.experimental.pallas import tpu as pltpu


def _label_smooth_kernel(n_ref, x_ref, t_ref, o_ref, acc_ref, *,
                         smoothing, tiles_per_split):
    p = pl.program_id(0)          # megacore split axis ("parallel")
    i = pl.program_id(1)          # row-tile reduction within split ("arbitrary")

    @pl.when(i == 0)
    def _():
        acc_ref[...] = jnp.zeros_like(acc_ref)

    x = x_ref[...].astype(jnp.float32)                     # (tile_n, C)
    tile_n, C = x.shape

    # Numerically stable per-row logsumexp (lane reduces).
    m = jnp.max(x, axis=-1, keepdims=True)
    lse = jnp.log(jnp.sum(jnp.exp(x - m), axis=-1, keepdims=True)) + m   # (tile_n, 1)

    # Fused weighted class reduction.  Since sum_c(w_c) == 1:
    #   sum_c(-w_c * log_prob_c) = sum_c w_c * (lse - x_c) = lse - sum_c(w_c * x_c)
    off = jnp.float32(smoothing / (C - 1.0)) if C > 1 else jnp.float32(0.0)
    on = jnp.float32(1.0 - smoothing)
    cls_idx = jax.lax.broadcasted_iota(jnp.int32, (tile_n, C), 1)
    tgt = t_ref[...]                                                      # (tile_n, 1) int32
    w = jnp.where(cls_idx == tgt, on, off)
    wsum = jnp.sum(w * x, axis=-1, keepdims=True)                         # (tile_n, 1)
    row_loss = lse - wsum

    # Mask rows past the true batch size (ragged last tile and clamped
    # duplicate tiles).  MUST remain a select (never a multiply): the garbage
    # rows of the ragged block may contain NaN/Inf.
    n_valid = n_ref[0]
    base = (p * tiles_per_split + i) * tile_n
    row_idx = base + jax.lax.broadcasted_iota(jnp.int32, (tile_n, 1), 0)
    row_loss = jnp.where(row_idx < n_valid, row_loss, 0.0)

    # Row-wise VMEM accumulation; single cross-sublane reduce in the epilogue.
    acc_ref[...] += row_loss

    @pl.when(i == pl.num_programs(1) - 1)
    def _():
        o_ref[...] = jnp.sum(acc_ref[...]).reshape(1, 1, 1)


def _round_up(x, m):
    return (x + m - 1) // m * m


def _chip_info():
    """Returns (vmem_capacity_bytes, tensorcores_per_chip), conservative fallbacks."""
    vmem_cap = 64 * 1024 * 1024        # v7x per-TC capacity: safe on every generation
    num_cores = 1
    try:
        info = pltpu.get_tpu_info()
        cap = int(getattr(info, "vmem_capacity_bytes", 0) or 0)
        if cap > 0:
            vmem_cap = cap
        for attr in ("num_tensorcores", "tensorcore_count", "num_cores",
                     "cores_per_chip"):
            v = getattr(info, attr, None)
            if v:
                num_cores = int(v)
                break
        else:
            kind = jax.devices()[0].device_kind.lower()
            if "v7" in kind or "7x" in kind:
                num_cores = 2
    except Exception:
        pass
    return vmem_cap, max(1, num_cores)


def label_smooth_loss(logits, targets, *, smoothing=0.0, tile_n=None, num_splits=None):
    """logits: [N, C] float (f32 or bf16, native dtype); targets: [N] int -> scalar f32."""
    N, C = logits.shape
    targets = targets.astype(jnp.int32).reshape(N, 1)
    itemsize = jnp.dtype(logits.dtype).itemsize

    vmem_cap, num_cores = _chip_info()
    # ~75% of this generation's per-core VMEM is the scoped budget
    # (v5e/v6e: ~96 MiB of 128; v7x: ~48 MiB of 64).
    vmem_limit = max(32 * 1024 * 1024, int(0.75 * vmem_cap))

    if num_splits is None:
        # Shard the batch reduction across TensorCores only where there are >1
        # (v7x); on single-TC parts (v5e/v6e) the split is pure overhead.
        num_splits = num_cores if N >= 16 * num_cores else 1
    num_splits = max(1, int(num_splits))

    if tile_n is None:
        # Per-row VMEM footprint: up-to-triple-buffered native logits tile plus
        # ~4 f32 working slabs (x, w, w*x, exp temp).  Spend about half the
        # scoped budget on it; multi-MiB native bytes per grid step keeps the
        # ~0.35 us/step overhead negligible (HBM-roofline regime).
        bytes_per_row = C * (3 * itemsize + 16)
        budget_rows = (vmem_limit // 2) // max(1, bytes_per_row)
        budget_rows = max(8, (budget_rows // 8) * 8)
        cap_by_n = _round_up(pl.cdiv(N, num_splits), 8)
        tile_n = min(8192, budget_rows, cap_by_n)
    tile_n = max(8, (int(tile_n) // 8) * 8)

    total_tiles = pl.cdiv(N, tile_n)
    if num_splits > total_tiles:
        num_splits = 1
    tiles_per_split = pl.cdiv(total_tiles, num_splits)

    # No host-side padding of logits: any grid point whose block index runs
    # past the last real tile is clamped to it (reads are in-bounds) and its
    # rows are masked out in-kernel via the logical row index.
    needs_clamp = num_splits * tiles_per_split > total_tiles

    def _block(p, i):
        t = p * tiles_per_split + i
        if needs_clamp:
            t = jnp.minimum(t, total_tiles - 1)
        return t

    x_map = lambda p, i, n: (_block(p, i), 0)
    t_map = lambda p, i, n: (_block(p, i), 0)

    # Deeper pipelining only when per-step transfers are small enough that DMA
    # latency could stay exposed (small C / bf16), and there are enough tiles.
    x_spec_kwargs = {}
    if (hasattr(pl, "Buffered") and tiles_per_split >= 4
            and tile_n * C * itemsize < (2 << 20)):
        x_spec_kwargs["pipeline_mode"] = pl.Buffered(3)

    kernel = functools.partial(
        _label_smooth_kernel,
        smoothing=float(smoothing),
        tiles_per_split=int(tiles_per_split),
    )

    n_valid = jnp.asarray([N], dtype=jnp.int32)   # SMEM scalar-prefetch operand

    partials = pl.pallas_call(
        kernel,
        out_shape=jax.ShapeDtypeStruct((num_splits, 1, 1), jnp.float32),
        grid_spec=pltpu.PrefetchScalarGridSpec(
            num_scalar_prefetch=1,
            grid=(num_splits, tiles_per_split),
            in_specs=[
                # logits tile: the big streaming input (native dtype).
                pl.BlockSpec((tile_n, C), x_map, **x_spec_kwargs),
                # target column: tiny, rides the same vector pipeline.
                pl.BlockSpec((tile_n, 1), t_map),
            ],
            out_specs=pl.BlockSpec((1, 1, 1), lambda p, i, n: (p, 0, 0)),
            scratch_shapes=[pltpu.VMEM((tile_n, 1), jnp.float32)],
        ),
        compiler_params=pltpu.CompilerParams(
            dimension_semantics=("parallel", "arbitrary"),
            vmem_limit_bytes=int(vmem_limit),
        ),
    )(n_valid, logits, targets)

    return jnp.sum(partials) / jnp.float32(N)


def label_smooth_loss_ref(logits, targets, smoothing=0.0):
    """Pure-JAX reference mirroring the PyTorch forward."""
    logits = logits.astype(jnp.float32)
    C = logits.shape[-1]
    log_prob = jax.nn.log_softmax(logits, axis=-1)
    weight = jnp.full_like(logits, smoothing / (C - 1.0))
    onehot = jax.nn.one_hot(targets, C, dtype=logits.dtype)
    weight = weight * (1.0 - onehot) + onehot * (1.0 - smoothing)
    return jnp.mean(jnp.sum(-weight * log_prob, axis=-1))


if __name__ == "__main__":
    key = jax.random.PRNGKey(0)
    k1, k2 = jax.random.split(key)

    smoothing = 0.1

    # Case 1: small, single-tile.
    N, C = 16, 32
    logits = jax.random.normal(k1, (N, C), dtype=jnp.float32)
    targets = jax.random.randint(k2, (N,), 0, C, dtype=jnp.int32)
    loss = jax.block_until_ready(label_smooth_loss(logits, targets, smoothing=smoothing))
    ref = label_smooth_loss_ref(logits, targets, smoothing=smoothing)
    assert jnp.allclose(loss, ref, rtol=1e-5, atol=1e-5), (loss, ref)

    # Case 2: ragged N (exercises the un-padded partial-tile mask path).
    N2 = 13
    logits2 = jax.random.normal(k1, (N2, C), dtype=jnp.float32)
    targets2 = jax.random.randint(k2, (N2,), 0, C, dtype=jnp.int32)
    loss2 = jax.block_until_ready(label_smooth_loss(logits2, targets2, smoothing=smoothing))
    ref2 = label_smooth_loss_ref(logits2, targets2, smoothing=smoothing)
    assert jnp.allclose(loss2, ref2, rtol=1e-5, atol=1e-5), (loss2, ref2)

    # Case 3: multi-tile reduction loop (forced small tile), single split.
    N3, C3 = 300, 160
    logits3 = jax.random.normal(k1, (N3, C3), dtype=jnp.float32)
    targets3 = jax.random.randint(k2, (N3,), 0, C3, dtype=jnp.int32)
    loss3 = jax.block_until_ready(
        label_smooth_loss(logits3, targets3, smoothing=smoothing, tile_n=64, num_splits=1))
    ref3 = label_smooth_loss_ref(logits3, targets3, smoothing=smoothing)
    assert jnp.allclose(loss3, ref3, rtol=1e-4, atol=1e-4), (loss3, ref3)

    # Case 4: two splits with a tile count that doesn't divide evenly
    # (exercises the clamped duplicate-tile path), bf16 input.
    logits4 = logits3.astype(jnp.bfloat16)
    loss4 = jax.block_until_ready(
        label_smooth_loss(logits4, targets3, smoothing=smoothing, tile_n=64, num_splits=2))
    ref4 = label_smooth_loss_ref(logits4, targets3, smoothing=smoothing)
    assert jnp.allclose(loss4, ref4, rtol=1e-4, atol=1e-4), (loss4, ref4)

    print("KERNEL_OK")
</pallas_src>

<mosaic_0001>
module attributes {stable_mosaic.version = 11 : i64} {
  func.func @_label_smooth_kernel(%arg0: i32, %arg1: i32, %arg2: memref<1xi32, #tpu.memory_space<smem>>, %arg3: memref<16x32xf32, #tpu.memory_space<vmem>>, %arg4: memref<16x1xi32, #tpu.memory_space<vmem>>, %arg5: memref<1x1x1xf32, #tpu.memory_space<vmem>>, %arg6: memref<16x1xf32, #tpu.memory_space<vmem>>) attributes {dimension_semantics = [#tpu.dimension_semantics<parallel>, #tpu.dimension_semantics<arbitrary>], iteration_bounds = array<i64: 1, 1>, scalar_prefetch = 1 : i64, scratch_operands = 1 : i64, tpu.core_type = #tpu.core_type<tc>, window_params = [{transform_indices = @transform_0, window_bounds = array<i64: 16, 32>}, {transform_indices = @transform_1, window_bounds = array<i64: 16, 1>}, {transform_indices = @transform_2, window_bounds = array<i64: 1, 1, 1>}]} {
    %c0_i32 = arith.constant 0 : i32
    %0 = arith.cmpi eq, %arg1, %c0_i32 : i32
    %1 = arith.extui %0 : i1 to i32
    %c0_i32_0 = arith.constant 0 : i32
    %2 = arith.cmpi ne, %1, %c0_i32_0 : i32
    scf.if %2 {
      %cst_16 = arith.constant 0.000000e+00 : f32
      %41 = vector.broadcast %cst_16 : f32 to vector<16x1xf32>
      %c0_17 = arith.constant 0 : index
      %c0_18 = arith.constant 0 : index
      %42 = vector.load %arg6[%c0_17, %c0_18] : memref<16x1xf32, #tpu.memory_space<vmem>>, vector<16x1xf32>
      tpu.vector_store %arg6[%c0_17, %c0_18], %41 {strides = array<i32>} : memref<16x1xf32, #tpu.memory_space<vmem>>, vector<16x1xf32>,
    } else {
    }
    %c0 = arith.constant 0 : index
    %c0_1 = arith.constant 0 : index
    %3 = vector.load %arg3[%c0, %c0_1] : memref<16x32xf32, #tpu.memory_space<vmem>>, vector<16x32xf32>
    %cst = arith.constant dense<0xFF800000> : vector<16xf32>
    %4 = vector.multi_reduction <maximumf>, %3, %cst [1] : vector<16x32xf32> to vector<16xf32>
    %5 = vector.shape_cast %4 : vector<16xf32> to vector<16x1xf32>
    %6 = vector.broadcast %5 : vector<16x1xf32> to vector<16x32xf32>
    %7 = arith.subf %3, %6 : vector<16x32xf32>
    %8 = math.exp %7 : vector<16x32xf32>
    %cst_2 = arith.constant dense<0.000000e+00> : vector<16xf32>
    %9 = vector.multi_reduction <add>, %8, %cst_2 [1] : vector<16x32xf32> to vector<16xf32>
    %10 = vector.shape_cast %9 : vector<16xf32> to vector<16x1xf32>
    %11 = math.log %10 : vector<16x1xf32>
    %12 = arith.addf %11, %5 : vector<16x1xf32>
    %13 = tpu.iota {dimensions = array<i32: 1>} : vector<16x32xi32>
    %c0_3 = arith.constant 0 : index
    %c0_4 = arith.constant 0 : index
    %14 = vector.load %arg4[%c0_3, %c0_4] : memref<16x1xi32, #tpu.memory_space<vmem>>, vector<16x1xi32>
    %15 = vector.broadcast %14 : vector<16x1xi32> to vector<16x32xi32>
    %16 = arith.cmpi eq, %13, %15 : vector<16x32xi32>
    %cst_5 = arith.constant 0.899999976 : f32
    %cst_6 = arith.constant 0.0032258064 : f32
    %17 = vector.broadcast %cst_5 : f32 to vector<16x32xf32>
    %18 = vector.broadcast %cst_6 : f32 to vector<16x32xf32>
    %19 = arith.select %16, %17, %18 : vector<16x32xi1>, vector<16x32xf32>
    %20 = arith.mulf %19, %3 : vector<16x32xf32>
    %cst_7 = arith.constant dense<0.000000e+00> : vector<16xf32>
    %21 = vector.multi_reduction <add>, %20, %cst_7 [1] : vector<16x32xf32> to vector<16xf32>
    %22 = vector.shape_cast %21 : vector<16xf32> to vector<16x1xf32>
    %23 = arith.subf %12, %22 : vector<16x1xf32>
    %c0_8 = arith.constant 0 : index
    %24 = memref.load %arg2[%c0_8] : memref<1xi32, #tpu.memory_space<smem>>
    %c1_i32 = arith.constant 1 : i32
    %25 = arith.muli %arg0, %c1_i32 : i32
    %26 = arith.addi %25, %arg1 : i32
    %c16_i32 = arith.constant 16 : i32
    %27 = arith.muli %26, %c16_i32 : i32
    %28 = tpu.iota {dimensions = array<i32: 0>} : vector<16x1xi32>
    %29 = vector.broadcast %27 : i32 to vector<16x1xi32>
    %30 = arith.addi %29, %28 : vector<16x1xi32>
    %31 = vector.broadcast %24 : i32 to vector<16x1xi32>
    %32 = arith.cmpi slt, %30, %31 : vector<16x1xi32>
    %cst_9 = arith.constant 0.000000e+00 : f32
    %33 = vector.broadcast %cst_9 : f32 to vector<16x1xf32>
    %34 = arith.select %32, %23, %33 : vector<16x1xi1>, vector<16x1xf32>
    %c0_10 = arith.constant 0 : index
    %c0_11 = arith.constant 0 : index
    %35 = vector.load %arg6[%c0_10, %c0_11] : memref<16x1xf32, #tpu.memory_space<vmem>>, vector<16x1xf32>
    %36 = arith.addf %35, %34 : vector<16x1xf32>
    %c0_12 = arith.constant 0 : index
    %c0_13 = arith.constant 0 : index
    %37 = vector.load %arg6[%c0_12, %c0_13] : memref<16x1xf32, #tpu.memory_space<vmem>>, vector<16x1xf32>
    tpu.vector_store %arg6[%c0_12, %c0_13], %36 {strides = array<i32>} : memref<16x1xf32, #tpu.memory_space<vmem>>, vector<16x1xf32>,
    %c0_i32_14 = arith.constant 0 : i32
    %38 = arith.cmpi eq, %arg1, %c0_i32_14 : i32
    %39 = arith.extui %38 : i1 to i32
    %c0_i32_15 = arith.constant 0 : i32
    %40 = arith.cmpi ne, %39, %c0_i32_15 : i32
    scf.if %40 {
      %c0_16 = arith.constant 0 : index
      %c0_17 = arith.constant 0 : index
      %41 = vector.load %arg6[%c0_16, %c0_17] : memref<16x1xf32, #tpu.memory_space<vmem>>, vector<16x1xf32>
      %42 = vector.shape_cast %41 : vector<16x1xf32> to vector<1x16x1xf32>
      %cst_18 = arith.constant dense<0.000000e+00> : vector<1xf32>
      %43 = vector.multi_reduction <add>, %42, %cst_18 [1, 2] : vector<1x16x1xf32> to vector<1xf32>
      %44 = vector.shape_cast %43 : vector<1xf32> to vector<1x1x1xf32>
      %45 = vector.extract %44[0, 0, 0] : f32 from vector<1x1x1xf32>
      %46 = vector.broadcast %45 : f32 to vector<1x1x1xf32>
      %c0_19 = arith.constant 0 : index
      %c0_20 = arith.constant 0 : index
      %c0_21 = arith.constant 0 : index
      %47 = vector.load %arg5[%c0_19, %c0_20, %c0_21] : memref<1x1x1xf32, #tpu.memory_space<vmem>>, vector<1x1x1xf32>
      tpu.vector_store %arg5[%c0_19, %c0_20, %c0_21], %46 {strides = array<i32>} : memref<1x1x1xf32, #tpu.memory_space<vmem>>, vector<1x1x1xf32>,
    } else {
    }
    return
  }
  func.func @transform_0(%arg0: i32, %arg1: i32, %arg2: memref<1xi32, #tpu.memory_space<smem>>) -> (i32, i32) {
    %c1_i32 = arith.constant 1 : i32
    %0 = arith.muli %arg0, %c1_i32 : i32
    %1 = arith.addi %0, %arg1 : i32
    %c0_i32 = arith.constant 0 : i32
    %c0_i32_0 = arith.constant 0 : i32
    return %1, %c0_i32 : i32, i32
  }
  func.func @transform_1(%arg0: i32, %arg1: i32, %arg2: memref<1xi32, #tpu.memory_space<smem>>) -> (i32, i32) {
    %c1_i32 = arith.constant 1 : i32
    %0 = arith.muli %arg0, %c1_i32 : i32
    %1 = arith.addi %0, %arg1 : i32
    %c0_i32 = arith.constant 0 : i32
    %c0_i32_0 = arith.constant 0 : i32
    return %1, %c0_i32 : i32, i32
  }
  func.func @transform_2(%arg0: i32, %arg1: i32, %arg2: memref<1xi32, #tpu.memory_space<smem>>) -> (i32, i32, i32) {
    %c0_i32 = arith.constant 0 : i32
    %c0_i32_0 = arith.constant 0 : i32
    %c0_i32_1 = arith.constant 0 : i32
    return %arg0, %c0_i32, %c0_i32_0 : i32, i32, i32
  }
}

</mosaic_0001>

<llo_original>
// kernel: tpu_custom_call.1
$region0: #{tpu_custom_call.1}
  #allocation0 [shape = 'u32[]', space=smem, size = 0x4, offset = 0x4, fixed_abs, tag = 'smem constant byte address 0x4 - core index']
  #allocation1 [shape = 'u32[144,128]{1,0:T(1,128)}', space=vmem, size = 0x12000, scoped, tag = 'internal scratch']
  #allocation2 [shape = 'f32[16,1]{1,0:T(8,128)}', space=vmem, size = 0x2000, scoped, tag = 'scratch operand']
  #allocation3 [shape = 's32[1]{0}', space=sflag, size = 0x4, scoped, tag = 'scoped memory for tpu_custom_call.1']
  #allocation4 [shape = 's32[1]{0:T(128)S(6)}', space=smem, size = 0x200, scoped, tag = 'prefetched SMEM operand 0']
  %s0 = inlined_call_operand.<no memory space> [shape: s32[1], index: 0, kind: input, shape index: {}]
  %s1 = inlined_call_operand.vmem [shape: f32[16,32], index: 1, kind: input, shape index: {}]
  %s2 = inlined_call_operand.vmem [shape: s32[16,1], index: 2, kind: input, shape index: {}]
  %s3 = inlined_call_operand.hbm [shape: f32[1,1,1], index: 3, kind: output, shape index: {}]
  %s4 = sld [smem:[#allocation0]]
  $region26: #{tpu_custom_call.1} parent=0
    _
  %s6 = ssub.s32 1, %s4
  %s7 = scalar_select 0, %s6, %s4
  %8 = sst [smem:[#allocation4]] %s0
  $region1: #{tpu_custom_call.1} parent=0
    #allocation5 [shape = 'u8[512]{0}', space=vmem, size = 0x400, scoped, tag = 'output window, operand 0, single buffered']
    #allocation6 [shape = 's32[1]{0}', space=sflag, size = 0x4, scoped, tag = 'scoped memory for tpu_custom_call.1']
    %9 = vsyncpa [#allocation6], 0
    // Predicated region
    $region2: #{tpu_custom_call.1} parent=1 // pred_check
      _
    $region3: #{tpu_custom_call.1} parent=1 // pred_check_branch
      %11 = sbr.rel (0) target = $region5
    $region4: #{tpu_custom_call.1} parent=1 // pred_region
      %s12 = sadd.s32 0, 0
      %s13 = smul.u32 2, %s12
      %p14 = scmp.lt.s32.totalorder %s13, 1
      %s15 = scalar_select %p14, %s13, 1
      %s16 = smul.addr %s15, 8
      %s17 = scalar_lea.vmem %s1, %s16
      %s18 = sadd.s32 0, 0
      %s19 = smul.u32 2, %s18
    $region5: #{tpu_custom_call.1} parent=1 // pred_fallthru
      _
    // Predicated region
    $region6: #{tpu_custom_call.1} parent=1 // pred_check
      _
    $region7: #{tpu_custom_call.1} parent=1 // pred_check_branch
      %21 = sbr.rel (0) target = $region9
    $region8: #{tpu_custom_call.1} parent=1 // pred_region
      %s22 = sadd.s32 0, 0
      %s23 = smul.u32 2, %s22
      %p24 = scmp.lt.s32.totalorder %s23, 1
      %s25 = scalar_select %p24, %s23, 1
      %s26 = smul.addr %s25, 8
      %s27 = scalar_lea.vmem %s2, %s26
      %s28 = sadd.s32 0, 0
      %s29 = smul.u32 2, %s28
    $region9: #{tpu_custom_call.1} parent=1 // pred_fallthru
      _
    %s30 = sadd.s32 0, 0
    %s31 = smul.u32 2, %s30
    %p32 = scmp.lt.s32.totalorder %s31, 1
    %s33 = scalar_select %p32, %s31, 1
    %s34 = smul.addr %s33, 8
    %s35 = scalar_lea.vmem %s1, %s34
    %s36 = sadd.s32 0, 0
    %s37 = smul.u32 2, %s36
    %p38 = scmp.lt.s32.totalorder %s37, 1
    %s39 = scalar_select %p38, %s37, 1
    %s40 = smul.addr %s39, 8
    %s41 = scalar_lea.vmem %s2, %s40
    %s42 = sadd.s32 0, 0
    %s43 = smul.u32 2, %s42
    %p44 = scmp.lt.s32.totalorder %s43, 1
    %s45 = scalar_select %p44, %s43, 1
    %s46 = smul.addr %s45, 8
    %s47 = scalar_lea.vmem %s1, %s46
    %s48 = sadd.s32 0, 0
    %s49 = smul.u32 2, %s48
    %s50 = sadd.s32 0, 0
    %s51 = smul.u32 2, %s50
    %p52 = scmp.lt.s32.totalorder %s51, 1
    %s53 = scalar_select %p52, %s51, 1
    %s54 = smul.addr %s53, 8
    %s55 = scalar_lea.vmem %s2, %s54
    %s56 = sadd.s32 0, 0
    %s57 = smul.u32 2, %s56
    %p58 = scmp.eq.s32.totalorder 0, 0
    // Predicated region
    $region10: #{tpu_custom_call.1} parent=1 // pred_check
      %p59 = pneg %p58
    $region11: #{tpu_custom_call.1} parent=1 // pred_check_branch
      %61 = sbr.rel (%p59) target = $region13
    $region12: #{tpu_custom_call.1} parent=1 // pred_region
      %vm62 = vcmask 7168
      %63 = vst.msk [vmem:[#allocation2] sm:$0xff] %vm62, 0.0
      %64 = vst.msk [vmem:[#allocation2 + $0x8] sm:$0xff] %vm62, 0.0
    $region13: #{tpu_custom_call.1} parent=1 // pred_fallthru
      _
    %v65 = vld [vmem:[%s47] sm:$0xff]
    %v66 = vld [vmem:[%s47 + $0x8] sm:$0xff]
    %vm67 = vcmask 261120
    %v68 = vsel %vm67, %v65, -inf
    %69 = vmax.xlane.f32.xlu0 %v68
    %v70 = vpop.xlane.xlu0 %69
    %v71 = vsel %vm67, %v66, -inf
    %72 = vmax.xlane.f32.xlu0 %v71
    %v73 = vpop.xlane.xlu0 %72
    %v74 = vsub.f32 %v65, %v70
    %v75 = vsub.f32 %v66, %v73
    %v76 = vmul.f32 %v74, 1.442695
    %v77 = vpow.pop %v76
    %v78 = vmul.f32 %v75, 1.442695
    %v79 = vpow.pop %v78
    %v80 = vsel %vm67, %v77, 0.0
    %81 = vadd.xlane.f32.xlu0 %v80
    %v82 = vpop.xlane.xlu0 %81
    %v83 = vsel %vm67, %v79, 0.0
    %84 = vadd.xlane.f32.xlu0 %v83
    %v85 = vpop.xlane.xlu0 %84
    %v86 = vlog2.pop %v82
    %v87 = vmul.f32 %v86, 0.6931472
    %v88 = vlog2.pop %v85
    %v89 = vmul.f32 %v88, 0.6931472
    %v90 = vadd.f32 %v87, %v70
    %v91 = vadd.f32 %v89, %v73
    %v92 = vlaneseq
    %v93 = vand.u32 %v92, 127
    %v94 = vld [vmem:[%s55] sm:$0xff]
    %v95 = vld [vmem:[%s55 + $0x8] sm:$0xff]
    %96 = vset.pattern.permute.xlu0 0
    %97 = vperm.xlu0 %96, %v94
    %v98 = vpop.permute.xlu0 %97
    %99 = vset.pattern.permute.xlu0 0
    %100 = vperm.xlu0 %99, %v95
    %v101 = vpop.permute.xlu0 %100
    %vm102 = vcmp.eq.s32.totalorder %v93, %v98
    %vm103 = vcmp.eq.s32.totalorder %v93, %v101
    %v104 = vsel %vm102, 0.9, 0.0032258064
    %v105 = vsel %vm103, 0.9, 0.0032258064
    %v106 = vmul.f32 %v104, %v65
    %v107 = vmul.f32 %v105, %v66
    %v108 = vsel %vm67, %v106, 0.0
    %109 = vadd.xlane.f32.xlu0 %v108
    %v110 = vpop.xlane.xlu0 %109
    %v111 = vsel %vm67, %v107, 0.0
    %112 = vadd.xlane.f32.xlu0 %v111
    %v113 = vpop.xlane.xlu0 %112
    %v114 = vsub.f32 %v90, %v110
    %v115 = vsub.f32 %v91, %v113
    %s116 = sld [smem:[#allocation4]]
    %s117 = sadd.s32 0, 0
    %s118 = smul.u32 %s117, 16
    %v119 = vlaneseq
    %v120 = vshrl.u32 %v119, 7
    %v121 = vadd.s32 %v120, 8
    %v122 = vstv %s118
    %v123 = vadd.s32 %v122, %v120
    %v124 = vadd.s32 %v122, %v121
    %v125 = vstv %s116
    %vm126 = vcmp.lt.s32.totalorder %v123, %v125
    %vm127 = vcmp.lt.s32.totalorder %v124, %v125
    %v128 = vsel %vm126, %v114, 0.0
    %v129 = vsel %vm127, %v115, 0.0
    %v130 = vld [vmem:[#allocation2] sm:$0xff]
    %v131 = vld [vmem:[#allocation2 + $0x8] sm:$0xff]
    %v132 = vadd.f32 %v130, %v128
    %v133 = vadd.f32 %v131, %v129
    %vm134 = vcmask 7168
    %135 = vst.msk [vmem:[#allocation2] sm:$0xff] %vm134, %v132
    %136 = vst.msk [vmem:[#allocation2 + $0x8] sm:$0xff] %vm134, %v133
    // Predicated region
    $region14: #{tpu_custom_call.1} parent=1 // pred_check
      %p137 = pneg %p58
    $region15: #{tpu_custom_call.1} parent=1 // pred_check_branch
      %139 = sbr.rel (%p137) target = $region17
    $region16: #{tpu_custom_call.1} parent=1 // pred_region
      %v140 = vld [vmem:[#allocation2] sm:$0xff]
      %v141 = vld [vmem:[#allocation2 + $0x8] sm:$0xff]
      %v142 = vsel %vm134, %v140, 0.0
      %v143 = vsel %vm134, %v141, 0.0
      %v144 = vadd.f32 %v142, %v143
      %145 = vadd.xlane.f32.xlu0 %v144
      %v146 = vpop.xlane.xlu0 %145
      %v147 = vrot.slane %v146, 4
      %v148 = vadd.f32 %v146, %v147
      %v149 = vrot.slane %v148, 2
      %v150 = vadd.f32 %v148, %v149
      %v151 = vrot.slane %v150, 1
      %v152 = vadd.f32 %v150, %v151
      %s153 = vtos %v152
      %v154 = vstv %s153
      %vm155 = vcmask 0
      %156 = vst.msk [vmem:[#allocation5] sm:$0x1] %vm155, %v154
    $region17: #{tpu_custom_call.1} parent=1 // pred_fallthru
      _
    // Predicated region
    $region18: #{tpu_custom_call.1} parent=1 // pred_check
      _
    $region19: #{tpu_custom_call.1} parent=1 // pred_check_branch
      %158 = sbr.rel (0) target = $region21
    $region20: #{tpu_custom_call.1} parent=1 // pred_region
      %s160 = ssub.s32 16, 16
      %161 = vsyncadd [#allocation6], %s160
      %s163 = sshll.u32 [#allocation5], 4
      %s164 = int_to_ptr.vmem [resolvable:$true] %s163
      %166 = dma.vmem_to_hbm [thread:$0]  %s164, 16, %s3, [#allocation6]
    $region21: #{tpu_custom_call.1} parent=1 // pred_fallthru
      _
    // Predicated region
    $region22: #{tpu_custom_call.1} parent=1 // pred_check
      _
    $region23: #{tpu_custom_call.1} parent=1 // pred_check_branch
      %168 = sbr.rel (0) target = $region25
    $region24: #{tpu_custom_call.1} parent=1 // pred_region
      %169 = dma.done [#allocation6], 16
    $region25: #{tpu_custom_call.1} parent=1 // pred_fallthru
      _
    %170 = vsyncpa [#allocation6], 1

</llo_original>
